<compile_context>
chip_gen: v7x
topology: tpu7x:2x2x1
jax: 0.10.0
libtpu: 0.0.40
codegen_flags: <defaults>
</compile_context>

<pallas_src>
import jax
import jax.numpy as jnp
from jax.experimental import pallas as pl
from jax.experimental.pallas import tpu as pltpu

BN_EPS = 1e-5


# --------------------------------------------------------------------------
# Kernel 1: env_encoder (BN folded into the Linears) + env half of decoder L1.
# Single invocation, everything fits in VMEM.
#   out = relu(relu(x @ w1f + b1f) @ w2f + b2f) @ wd1e + bd1        (B, H3)
# --------------------------------------------------------------------------
def env_proj_kernel(x_ref, w1_ref, b1_ref, w2_ref, b2_ref, wd1e_ref, bd1_ref, o_ref):
    h = jnp.dot(x_ref[...], w1_ref[...], preferred_element_type=jnp.float32) + b1_ref[...]
    h = jnp.maximum(h, 0.0)                                               # (B, H1)
    # Dropout: identity in eval mode.
    e = jnp.dot(h, w2_ref[...], preferred_element_type=jnp.float32) + b2_ref[...]
    e = jnp.maximum(e, 0.0)                                               # (B, H2)
    o_ref[...] = (jnp.dot(e, wd1e_ref[...], preferred_element_type=jnp.float32)
                  + bd1_ref[...])                                         # (B, H3)


# --------------------------------------------------------------------------
# Kernel 2: fused spatial_encoder + decoder for one tile of TN grid nodes.
# Transposed layout: the node axis TN is the lane axis everywhere.
#   envp_ref : (H3, B)   env @ Wd1_env + bd1, one column per sample (resident)
#   spt_ref  : (3, TN)   spatial tile
#   ws2t_ref : (S, S)    spatial_encoder layer-2 weight, transposed
#   wd1st_ref: (H3, S)   spatial half of decoder layer-1 weight, transposed
#   cols_ref : (H3, 7)   packed small params: [wd2 | bs1 | bs2 | ws1ᵀ (3 cols) | bd2]
#   o_ref    : (B, TN)
# --------------------------------------------------------------------------
def spatial_decoder_kernel(envp_ref, spt_ref, ws2t_ref, wd1st_ref, cols_ref, o_ref):
    S = ws2t_ref.shape[0]
    B = envp_ref.shape[1]

    cols = cols_ref[...]
    wd2_col = cols[:, 0:1]                                                # (H3, 1)
    bs1_col = cols[0:S, 1:2]                                              # (S, 1)
    bs2_col = cols[0:S, 2:3]                                              # (S, 1)
    ws1t = cols[0:S, 3:6]                                                 # (S, 3)
    bd2 = cols[0:1, 6:7]                                                  # (1, 1)

    sp = spt_ref[...]                                                     # (3, TN)

    # spatial_encoder layer 1: K=3 contraction as 3 VPU broadcast-FMAs (skip MXU).
    s = (bs1_col
         + ws1t[:, 0:1] * sp[0:1, :]
         + ws1t[:, 1:2] * sp[1:2, :]
         + ws1t[:, 2:3] * sp[2:3, :])
    s = jnp.maximum(s, 0.0)                                               # (S, TN)

    # spatial_encoder layer 2 on the MXU (lane-dense TN output).
    sf = jnp.maximum(
        jnp.dot(ws2t_ref[...], s, preferred_element_type=jnp.float32) + bs2_col,
        0.0)                                                              # (S, TN)

    # spatial half of decoder layer 1.
    sp_proj = jnp.dot(wd1st_ref[...], sf, preferred_element_type=jnp.float32)  # (H3, TN)

    # decoder per sample: relu(sp_proj + env column), weighted sublane-reduce over H3.
    envp = envp_ref[...]                                                  # (H3, B)
    rows = []
    for b in range(B):                                                    # B is small & static
        h_b = jnp.maximum(sp_proj + envp[:, b:b + 1], 0.0)                # (H3, TN)
        # Dropout: identity in eval mode.
        rows.append(jnp.sum(h_b * wd2_col, axis=0, keepdims=True))        # (1, TN)
    o_ref[...] = jnp.concatenate(rows, axis=0) + bd2                      # (B, TN)


# --------------------------------------------------------------------------
# One-time parameter packing (outside the hot path)
# --------------------------------------------------------------------------
def pack_params(raw):
    """Fold eval-mode BatchNorm into the Linears, transpose the spatial-path
    weights (node axis on lanes) and pack the tiny per-channel vectors into a
    single (H3, 7) block."""
    (w1, b1, g1, be1, m1, v1,
     w2, b2, g2, be2, m2, v2,
     ws1, bs1, ws2, bs2,
     wd1e, wd1s, bd1, wd2_row, bd2) = raw

    s1 = g1 * jax.lax.rsqrt(v1 + BN_EPS)                  # (1, H1)
    w1f = w1 * s1
    b1f = (b1 - m1) * s1 + be1
    s2 = g2 * jax.lax.rsqrt(v2 + BN_EPS)                  # (1, H2)
    w2f = w2 * s2
    b2f = (b2 - m2) * s2 + be2

    S = ws1.shape[1]
    H3 = wd1e.shape[1]
    assert S <= H3, "packing assumes spatial_embedding_dim <= hidden_sizes[2]"

    cols = jnp.zeros((H3, 7), jnp.float32)
    cols = cols.at[:, 0].set(wd2_row.reshape(H3))
    cols = cols.at[:S, 1].set(bs1.reshape(S))
    cols = cols.at[:S, 2].set(bs2.reshape(S))
    cols = cols.at[:S, 3:6].set(ws1.T)
    cols = cols.at[:, 6].set(bd2.reshape(()))

    return (w1f, b1f, w2f, b2f, wd1e, bd1, ws2.T, wd1s.T, cols)


# --------------------------------------------------------------------------
# Wrapper
# --------------------------------------------------------------------------
def forward(x, packed, spatial_t, *, tile_n=512):
    (w1f, b1f, w2f, b2f, wd1e, bd1, ws2t, wd1st, cols) = packed
    B = x.shape[0]
    H3 = wd1e.shape[1]
    S = ws2t.shape[0]
    N = spatial_t.shape[1]

    # Kernel 1: env encoder + env projection (single invocation).
    env_proj = pl.pallas_call(
        env_proj_kernel,
        out_shape=jax.ShapeDtypeStruct((B, H3), jnp.float32),
    )(x, w1f, b1f, w2f, b2f, wd1e, bd1)

    # Layout plumbing only (tiny): each sample becomes a sublane column that
    # broadcasts over the lane-dense node axis inside kernel 2.
    envp_t = env_proj.T                                                   # (H3, B)

    # Pad the node axis to a multiple of the tile (the real output_size=165590
    # is not a multiple of any tile); padded nodes are computed and dropped.
    n_pad = pl.cdiv(N, tile_n) * tile_n
    if n_pad != N:
        spatial_t = jnp.pad(spatial_t, ((0, 0), (0, n_pad - N)))

    out = pl.pallas_call(
        spatial_decoder_kernel,
        out_shape=jax.ShapeDtypeStruct((B, n_pad), jnp.float32),
        grid_spec=pltpu.PrefetchScalarGridSpec(
            num_scalar_prefetch=0,
            grid=(n_pad // tile_n,),
            in_specs=[
                pl.BlockSpec((H3, B), lambda j: (0, 0)),       # envp_t (resident)
                pl.BlockSpec((3, tile_n), lambda j: (0, j)),   # spatial tile
                pl.BlockSpec((S, S), lambda j: (0, 0)),        # ws2t
                pl.BlockSpec((H3, S), lambda j: (0, 0)),       # wd1st
                pl.BlockSpec((H3, 7), lambda j: (0, 0)),       # packed small params
            ],
            out_specs=pl.BlockSpec((B, tile_n), lambda j: (0, j)),
        ),
        compiler_params=pltpu.CompilerParams(
            dimension_semantics=("parallel",)),
    )(envp_t, spatial_t, ws2t, wd1st, cols)

    if n_pad != N:
        out = out[:, :N]
    return out


# --------------------------------------------------------------------------
# Pure-JAX reference (mirrors the PyTorch forward exactly, incl. the concat
# and unfused BatchNorm), using the RAW parameters.
# --------------------------------------------------------------------------
def reference(x, raw, spatial_input):
    (w1, b1, g1, be1, m1, v1,
     w2, b2, g2, be2, m2, v2,
     ws1, bs1, ws2, bs2,
     wd1e, wd1s, bd1, wd2_row, bd2) = raw
    h = jnp.dot(x, w1) + b1
    h = (h - m1) / jnp.sqrt(v1 + BN_EPS) * g1 + be1
    h = jnp.maximum(h, 0.0)
    h = jnp.dot(h, w2) + b2
    h = (h - m2) / jnp.sqrt(v2 + BN_EPS) * g2 + be2
    env = jnp.maximum(h, 0.0)                                             # (B, H2)

    s = jnp.maximum(jnp.dot(spatial_input, ws1) + bs1, 0.0)
    sf = jnp.maximum(jnp.dot(s, ws2) + bs2, 0.0)                          # (N, S)

    B, N = x.shape[0], spatial_input.shape[0]
    env_e = jnp.broadcast_to(env[:, None, :], (B, N, env.shape[1]))
    sp_e = jnp.broadcast_to(sf[None, :, :], (B, N, sf.shape[1]))
    combined = jnp.concatenate([env_e, sp_e], axis=2)                     # (B, N, H2+S)
    wd1 = jnp.concatenate([wd1e, wd1s], axis=0)                           # (H2+S, H3)
    hh = jnp.maximum(jnp.dot(combined, wd1) + bd1, 0.0)                   # (B, N, H3)
    out = jnp.sum(hh * wd2_row, axis=-1) + bd2                            # (B, N)
    return out


# --------------------------------------------------------------------------
# Deterministic parameter initialization (PyTorch-style uniform bounds)
# --------------------------------------------------------------------------
def linear_init(key, fan_in, fan_out):
    kw, kb = jax.random.split(key)
    bound = 1.0 / float(fan_in) ** 0.5
    w = jax.random.uniform(kw, (fan_in, fan_out), jnp.float32, -bound, bound)
    b = jax.random.uniform(kb, (1, fan_out), jnp.float32, -bound, bound)
    return w, b


def bn_init(key, dim):
    k1, k2, k3, k4 = jax.random.split(key, 4)
    gamma = 1.0 + 0.1 * jax.random.uniform(k1, (1, dim), jnp.float32)
    beta = 0.1 * jax.random.uniform(k2, (1, dim), jnp.float32, -1.0, 1.0)
    mean = 0.1 * jax.random.uniform(k3, (1, dim), jnp.float32, -1.0, 1.0)
    var = 1.0 + 0.2 * jax.random.uniform(k4, (1, dim), jnp.float32)
    return gamma, beta, mean, var


if __name__ == "__main__":
    # Small, structure-preserving shapes.
    B = 2
    F_IN = 25                       # input_size
    H1, H2, H3 = 256, 128, 64       # hidden_sizes
    S = 16                          # spatial_embedding_dim
    N = 4000                        # output_size (NOT a tile multiple -> exercises padding)
    TILE_N = 512                    # 8 grid steps -> both TensorCores usable on v7x

    root = jax.random.PRNGKey(0)
    keys = jax.random.split(root, 12)

    w1, b1 = linear_init(keys[0], F_IN, H1)
    g1, be1, m1, v1 = bn_init(keys[1], H1)
    w2, b2 = linear_init(keys[2], H1, H2)
    g2, be2, m2, v2 = bn_init(keys[3], H2)
    ws1, bs1 = linear_init(keys[4], 3, S)
    ws2, bs2 = linear_init(keys[5], S, S)
    wd1, bd1 = linear_init(keys[6], H2 + S, H3)      # decoder layer over cat([env, sp])
    wd1e, wd1s = wd1[:H2], wd1[H2:]                  # split along the concat axis
    wd2, bd2v = linear_init(keys[7], H3, 1)
    wd2_row = wd2.reshape(1, H3)                     # Linear(H3, 1) as a row vector
    bd2 = bd2v.reshape(1, 1)

    raw = (w1, b1, g1, be1, m1, v1,
           w2, b2, g2, be2, m2, v2,
           ws1, bs1, ws2, bs2,
           wd1e, wd1s, bd1, wd2_row, bd2)
    packed = pack_params(raw)

    # Inputs: environmental features + normalized spatial buffers.
    x = jax.random.normal(keys[8], (B, F_IN), jnp.float32)
    coords = jax.random.uniform(keys[9], (N, 2), jnp.float32)     # normalized x,y in [0,1]
    bed = jax.random.uniform(keys[10], (N, 1), jnp.float32)       # normalized bed level
    spatial_input = jnp.concatenate([coords, bed], axis=1)        # (N, 3) as in the buffers
    spatial_t = spatial_input.T                                   # (3, N): one-time layout transform

    out = forward(x, packed, spatial_t, tile_n=TILE_N)
    out = jax.block_until_ready(out)

    ref = jax.block_until_ready(reference(x, raw, spatial_input))
    assert out.shape == (B, N) and out.dtype == jnp.float32
    err = float(jnp.max(jnp.abs(out - ref)))
    assert jnp.allclose(out, ref, atol=1e-2, rtol=1e-2), err

    print("KERNEL_OK")
</pallas_src>

<mosaic_0001>
module attributes {stable_mosaic.version = 11 : i64} {
  func.func @env_proj_kernel(%arg0: memref<2x25xf32, #tpu.memory_space<vmem>>, %arg1: memref<25x256xf32, #tpu.memory_space<vmem>>, %arg2: memref<1x256xf32, #tpu.memory_space<vmem>>, %arg3: memref<256x128xf32, #tpu.memory_space<vmem>>, %arg4: memref<1x128xf32, #tpu.memory_space<vmem>>, %arg5: memref<128x64xf32, #tpu.memory_space<vmem>>, %arg6: memref<1x64xf32, #tpu.memory_space<vmem>>, %arg7: memref<2x64xf32, #tpu.memory_space<vmem>>) attributes {dimension_semantics = [], scalar_prefetch = 0 : i64, scratch_operands = 0 : i64, tpu.core_type = #tpu.core_type<tc>} {
    %c0 = arith.constant 0 : index
    %c0_0 = arith.constant 0 : index
    %0 = vector.load %arg0[%c0, %c0_0] : memref<2x25xf32, #tpu.memory_space<vmem>>, vector<2x25xf32>
    %c0_1 = arith.constant 0 : index
    %c0_2 = arith.constant 0 : index
    %1 = vector.load %arg1[%c0_1, %c0_2] : memref<25x256xf32, #tpu.memory_space<vmem>>, vector<25x256xf32>
    %cst = arith.constant dense<0.000000e+00> : vector<2x256xf32>
    %2 = tpu.matmul %0, %1, %cst {dimension_numbers = #tpu.dot_dimension_numbers<[1], [0], [0], [1], [0, 0, 1, 1], [], []>} : vector<2x25xf32>, vector<25x256xf32>, vector<2x256xf32> -> vector<2x256xf32>
    %c0_3 = arith.constant 0 : index
    %c0_4 = arith.constant 0 : index
    %3 = vector.load %arg2[%c0_3, %c0_4] : memref<1x256xf32, #tpu.memory_space<vmem>>, vector<1x256xf32>
    %4 = vector.broadcast %3 : vector<1x256xf32> to vector<2x256xf32>
    %5 = arith.addf %2, %4 : vector<2x256xf32>
    %cst_5 = arith.constant 0.000000e+00 : f32
    %6 = vector.broadcast %cst_5 : f32 to vector<2x256xf32>
    %7 = arith.maximumf %5, %6 : vector<2x256xf32>
    %c0_6 = arith.constant 0 : index
    %c0_7 = arith.constant 0 : index
    %8 = vector.load %arg3[%c0_6, %c0_7] : memref<256x128xf32, #tpu.memory_space<vmem>>, vector<256x128xf32>
    %cst_8 = arith.constant dense<0.000000e+00> : vector<2x128xf32>
    %9 = tpu.matmul %7, %8, %cst_8 {dimension_numbers = #tpu.dot_dimension_numbers<[1], [0], [0], [1], [0, 0, 1, 1], [], []>} : vector<2x256xf32>, vector<256x128xf32>, vector<2x128xf32> -> vector<2x128xf32>
    %c0_9 = arith.constant 0 : index
    %c0_10 = arith.constant 0 : index
    %10 = vector.load %arg4[%c0_9, %c0_10] : memref<1x128xf32, #tpu.memory_space<vmem>>, vector<1x128xf32>
    %11 = vector.broadcast %10 : vector<1x128xf32> to vector<2x128xf32>
    %12 = arith.addf %9, %11 : vector<2x128xf32>
    %cst_11 = arith.constant 0.000000e+00 : f32
    %13 = vector.broadcast %cst_11 : f32 to vector<2x128xf32>
    %14 = arith.maximumf %12, %13 : vector<2x128xf32>
    %c0_12 = arith.constant 0 : index
    %c0_13 = arith.constant 0 : index
    %15 = vector.load %arg5[%c0_12, %c0_13] : memref<128x64xf32, #tpu.memory_space<vmem>>, vector<128x64xf32>
    %cst_14 = arith.constant dense<0.000000e+00> : vector<2x64xf32>
    %16 = tpu.matmul %14, %15, %cst_14 {dimension_numbers = #tpu.dot_dimension_numbers<[1], [0], [0], [1], [0, 0, 1, 1], [], []>} : vector<2x128xf32>, vector<128x64xf32>, vector<2x64xf32> -> vector<2x64xf32>
    %c0_15 = arith.constant 0 : index
    %c0_16 = arith.constant 0 : index
    %17 = vector.load %arg6[%c0_15, %c0_16] : memref<1x64xf32, #tpu.memory_space<vmem>>, vector<1x64xf32>
    %18 = vector.broadcast %17 : vector<1x64xf32> to vector<2x64xf32>
    %19 = arith.addf %16, %18 : vector<2x64xf32>
    %c0_17 = arith.constant 0 : index
    %c0_18 = arith.constant 0 : index
    %20 = vector.load %arg7[%c0_17, %c0_18] : memref<2x64xf32, #tpu.memory_space<vmem>>, vector<2x64xf32>
    tpu.vector_store %arg7[%c0_17, %c0_18], %19 {strides = array<i32>} : memref<2x64xf32, #tpu.memory_space<vmem>>, vector<2x64xf32>,
    return
  }
}

</mosaic_0001>

<llo_original>
// kernel: tpu_custom_call.1
$region0: #{tpu_custom_call.1}
  #allocation0 [shape = 'u32[]', space=smem, size = 0x4, offset = 0x4, fixed_abs, tag = 'smem constant byte address 0x4 - core index']
  #allocation1 [shape = 'u32[144,128]{1,0:T(1,128)}', space=vmem, size = 0x12000, scoped, tag = 'internal scratch']
  %s0 = inlined_call_operand.vmem [shape: f32[2,25], index: 0, kind: input, shape index: {}]
  %s1 = inlined_call_operand.vmem [shape: f32[25,256], index: 1, kind: input, shape index: {}]
  %s2 = inlined_call_operand.vmem [shape: f32[1,256], index: 2, kind: input, shape index: {}]
  %s3 = inlined_call_operand.hbm [shape: f32[256,128], index: 3, kind: input, shape index: {}]
  %s4 = inlined_call_operand.vmem [shape: f32[1,128], index: 4, kind: input, shape index: {}]
  %s5 = inlined_call_operand.vmem [shape: f32[128,64], index: 5, kind: input, shape index: {}]
  %s6 = inlined_call_operand.vmem [shape: f32[1,64], index: 6, kind: input, shape index: {}]
  %s7 = inlined_call_operand.hbm [shape: f32[2,64], index: 7, kind: output, shape index: {}]
  %s8 = sld [smem:[#allocation0]]
  $region42: #{tpu_custom_call.1} parent=0
    _
  %s10 = ssub.s32 1, %s8
  %s11 = scalar_select 0, %s10, %s8
  $region1: #{tpu_custom_call.1} parent=0
    #allocation2 [shape = 'u8[131072]{0}', space=vmem, size = 0x20000, scoped, tag = 'input window, operand 3, single buffered']
    #allocation3 [shape = 's32[1]{0}', space=sflag, size = 0x4, scoped, tag = 'scoped memory for tpu_custom_call.1']
    #allocation4 [shape = 's32[1]{0}', space=sflag, size = 0x4, scoped, tag = 'scoped memory for tpu_custom_call.1']
    #allocation5 [shape = 'u8[1024]{0}', space=vmem, size = 0x400, scoped, tag = 'output window, operand 0, single buffered']
    %12 = vsyncpa [#allocation3], 0
    %13 = vsyncpa [#allocation4], 0
    // Predicated region
    $region2: #{tpu_custom_call.1} parent=1 // pred_check
      _
    $region3: #{tpu_custom_call.1} parent=1 // pred_check_branch
      %15 = sbr.rel (0) target = $region5
    $region4: #{tpu_custom_call.1} parent=1 // pred_region
      _
    $region5: #{tpu_custom_call.1} parent=1 // pred_fallthru
      _
    // Predicated region
    $region6: #{tpu_custom_call.1} parent=1 // pred_check
      _
    $region7: #{tpu_custom_call.1} parent=1 // pred_check_branch
      %17 = sbr.rel (0) target = $region9
    $region8: #{tpu_custom_call.1} parent=1 // pred_region
      _
    $region9: #{tpu_custom_call.1} parent=1 // pred_fallthru
      _
    // Predicated region
    $region10: #{tpu_custom_call.1} parent=1 // pred_check
      _
    $region11: #{tpu_custom_call.1} parent=1 // pred_check_branch
      %19 = sbr.rel (0) target = $region13
    $region12: #{tpu_custom_call.1} parent=1 // pred_region
      _
    $region13: #{tpu_custom_call.1} parent=1 // pred_fallthru
      _
    // Predicated region
    $region14: #{tpu_custom_call.1} parent=1 // pred_check
      _
    $region15: #{tpu_custom_call.1} parent=1 // pred_check_branch
      %21 = sbr.rel (0) target = $region17
    $region16: #{tpu_custom_call.1} parent=1 // pred_region
      %s23 = ssub.s32 4096, 4096
      %24 = vsyncadd [#allocation3], %s23
      %s25 = sshll.u32 [#allocation2], 4
      %s26 = int_to_ptr.vmem [resolvable:$true] %s25
      %31 = dma.hbm_to_vmem [thread:$0]  %s3, 4096, %s26, [#allocation3], 128, 128, 8
    $region17: #{tpu_custom_call.1} parent=1 // pred_fallthru
      _
    // Predicated region
    $region18: #{tpu_custom_call.1} parent=1 // pred_check
      _
    $region19: #{tpu_custom_call.1} parent=1 // pred_check_branch
      %33 = sbr.rel (0) target = $region21
    $region20: #{tpu_custom_call.1} parent=1 // pred_region
      _
    $region21: #{tpu_custom_call.1} parent=1 // pred_fallthru
      _
    // Predicated region
    $region22: #{tpu_custom_call.1} parent=1 // pred_check
      _
    $region23: #{tpu_custom_call.1} parent=1 // pred_check_branch
      %35 = sbr.rel (0) target = $region25
    $region24: #{tpu_custom_call.1} parent=1 // pred_region
      _
    $region25: #{tpu_custom_call.1} parent=1 // pred_fallthru
      _
    // Predicated region
    $region26: #{tpu_custom_call.1} parent=1 // pred_check
      _
    $region27: #{tpu_custom_call.1} parent=1 // pred_check_branch
      %37 = sbr.rel (0) target = $region29
    $region28: #{tpu_custom_call.1} parent=1 // pred_region
      _
    $region29: #{tpu_custom_call.1} parent=1 // pred_fallthru
      _
    // Predicated region
    $region30: #{tpu_custom_call.1} parent=1 // pred_check
      _
    $region31: #{tpu_custom_call.1} parent=1 // pred_check_branch
      %39 = sbr.rel (0) target = $region33
    $region32: #{tpu_custom_call.1} parent=1 // pred_region
      %40 = dma.done [#allocation3], 4096
    $region33: #{tpu_custom_call.1} parent=1 // pred_fallthru
      _
    %v41 = vld [vmem:[%s0] sm:$0x3]
    %v42 = vld [vmem:[%s1] sm:$0xff]
    %v43 = vld [vmem:[%s1 + $0x8] sm:$0xff]
    %v44 = vld [vmem:[%s1 + $0x10] sm:$0xff]
    %v45 = vld [vmem:[%s1 + $0x18] sm:$0xff]
    %v46 = vld [vmem:[%s1 + $0x20] sm:$0xff]
    %v47 = vld [vmem:[%s1 + $0x28] sm:$0xff]
    %v48 = vld [vmem:[%s1 + $0x30] sm:$0x1]
    %v49 = vld [vmem:[%s1 + $0x38] sm:$0x1]
    %v50 = vld [vmem:[%s2] sm:$0x3]
    %v52 = vlaneseq
    %v53 = vshrl.u32 %v52, 7
    %v54 = vsub.s32 0, %v53
    %v55 = vrot.slane %v50, %v54
    %v56 = vlaneseq
    %v57 = vshrl.u32 %v56, 7
    %v58 = vsub.s32 1, %v57
    %v59 = vrot.slane %v50, %v58
    %vm62 = vcmask 203776
    %v64 = vsel %vm62, %v41, 0
    %vm66 = vcmask 1040384
    %v68 = vsel %vm66, %v48, 0
    %v71 = vsel %vm66, %v49, 0
    %73 = vmatprep.subr.mxu0 %v43
    %74 = vmatpush1.msra.mxu0 %v42
    %75 = vmatprep.subr.mxu0 %v45
    %76 = vmatpush1.msra.mxu0 %v44
    %77 = vmatprep.subr.mxu0 %v47
    %78 = vmatpush1.msra.mxu0 %v46
    %79 = vmatprep.subr.mxu0 %v71
    %80 = vmatpush1.msra.mxu0 %v68
    %81 = vmatprep.subr.mxu0 0.0
    %82 = vmatpush1.msra.mxu0 0.0
    %83 = vmatprep.subr.mxu0 0.0
    %84 = vmatpush1.msra.mxu0 0.0
    %85 = vmatprep.subr.mxu0 0.0
    %86 = vmatpush1.msra.mxu0 0.0
    %87 = vmatprep.subr.mxu0 0.0
    %88 = vmatpush1.msra.mxu0 0.0
    %89 = vmatprep.subr.mxu0 0.0
    %90 = vmatpush1.msra.mxu0 0.0
    %91 = vmatprep.subr.mxu0 0.0
    %92 = vmatpush1.msra.mxu0 0.0
    %93 = vmatprep.subr.mxu0 0.0
    %94 = vmatpush1.msra.mxu0 0.0
    %95 = vmatprep.subr.mxu0 0.0
    %96 = vmatpush1.msra.mxu0 0.0
    %97 = vmatprep.subr.mxu0 0.0
    %98 = vmatpush1.msra.mxu0 0.0
    %99 = vmatprep.subr.mxu0 0.0
    %100 = vmatpush1.msra.mxu0 0.0
    %101 = vmatprep.subr.mxu0 0.0
    %102 = vmatpush1.msra.mxu0 0.0
    %103 = vmatprep.subr.mxu0 0.0
    %104 = vmatpush1.msra.mxu0 0.0
    %105 = vmatprep.subr.mxu0 0.0
    %106 = vmatpush1.msra.mxu0 0.0
    %107 = vmatprep.subr.mxu0 0.0
    %108 = vmatpush1.msra.mxu0 0.0
    %109 = vmatprep.subr.mxu0 0.0
    %110 = vmatpush1.msra.mxu0 0.0
    %111 = vmatprep.subr.mxu0 0.0
    %112 = vmatpush1.msra.mxu0 0.0
    %113 = vmatprep.subr.mxu0 0.0
    %114 = vmatpush1.msra.mxu0 0.0
    %115 = vmatprep.subr.mxu0 0.0
    %116 = vmatpush1.msra.mxu0 0.0
    %117 = vmatprep.subr.mxu0 0.0
    %118 = vmatpush1.msra.mxu0 0.0
    %119 = vmatprep.subr.mxu0 0.0
    %120 = vmatpush1.msra.mxu0 0.0
    %121 = vmatprep.subr.mxu0 0.0
    %122 = vmatpush1.msra.mxu0 0.0
    %123 = vmatprep.subr.mxu0 0.0
    %124 = vmatpush1.msra.mxu0 0.0
    %125 = vmatprep.subr.mxu0 0.0
    %126 = vmatpush1.msra.mxu0 0.0
    %127 = vmatprep.subr.mxu0 0.0
    %128 = vmatpush1.msra.mxu0 0.0
    %129 = vmatprep.subr.mxu0 0.0
    %130 = vmatpush1.msra.mxu0 0.0
    %131 = vmatprep.subr.mxu0 0.0
    %132 = vmatpush1.msra.mxu0 0.0
    %133 = vmatprep.subr.mxu0 0.0
    %134 = vmatpush1.msra.mxu0 0.0
    %135 = vmatprep.subr.mxu0 0.0
    %136 = vmatpush1.msra.mxu0 0.0
    %137 = vmatprep.mubr.f32.mxu0 0.0
    %138 = vmatmul.mubr.f32.gmra.mrb[0].mxu0 %v64
    %v139 = vpop.f32.mrb[0].mxu0
    %v140 = vadd.f32 %v55, %v139
    %v141 = vpop.f32.mrb[0].mxu0
    %v142 = vadd.f32 %v59, %v141
    %143 = vdwg.mxu0
    %v144 = vmax.f32 %v140, 0.0
    %v145 = vmax.f32 %v142, 0.0
    %v146 = vld [vmem:[#allocation2] sm:$0xff]
    %v147 = vld [vmem:[#allocation2 + $0x8] sm:$0xff]
    %v148 = vld [vmem:[#allocation2 + $0x10] sm:$0xff]
    %v149 = vld [vmem:[#allocation2 + $0x18] sm:$0xff]
    %v150 = vld [vmem:[#allocation2 + $0x20] sm:$0xff]
    %v151 = vld [vmem:[#allocation2 + $0x28] sm:$0xff]
    %v152 = vld [vmem:[#allocation2 + $0x30] sm:$0xff]
    %v153 = vld [vmem:[#allocation2 + $0x38] sm:$0xff]
    %v154 = vld [vmem:[#allocation2 + $0x40] sm:$0xff]
    %v155 = vld [vmem:[#allocation2 + $0x48] sm:$0xff]
    %v156 = vld [vmem:[#allocation2 + $0x50] sm:$0xff]
    %v157 = vld [vmem:[#allocation2 + $0x58] sm:$0xff]
    %v158 = vld [vmem:[#allocation2 + $0x60] sm:$0xff]
    %v159 = vld [vmem:[#allocation2 + $0x68] sm:$0xff]
    %v160 = vld [vmem:[#allocation2 + $0x70] sm:$0xff]
    %v161 = vld [vmem:[#allocation2 + $0x78] sm:$0xff]
    %v162 = vld [vmem:[#allocation2 + $0x80] sm:$0xff]
    %v163 = vld [vmem:[#allocation2 + $0x88] sm:$0xff]
    %v164 = vld [vmem:[#allocation2 + $0x90] sm:$0xff]
    %v165 = vld [vmem:[#allocation2 + $0x98] sm:$0xff]
    %v166 = vld [vmem:[#allocation2 + $0xa0] sm:$0xff]
    %v167 = vld [vmem:[#allocation2 + $0xa8] sm:$0xff]
    %v168 = vld [vmem:[#allocation2 + $0xb0] sm:$0xff]
    %v169 = vld [vmem:[#allocation2 + $0xb8] sm:$0xff]
    %v170 = vld [vmem:[#allocation2 + $0xc0] sm:$0xff]
    %v171 = vld [vmem:[#allocation2 + $0xc8] sm:$0xff]
    %v172 = vld [vmem:[#allocation2 + $0xd0] sm:$0xff]
    %v173 = vld [vmem:[#allocation2 + $0xd8] sm:$0xff]
    %v174 = vld [vmem:[#allocation2 + $0xe0] sm:$0xff]
    %v175 = vld [vmem:[#allocation2 + $0xe8] sm:$0xff]
    %v176 = vld [vmem:[#allocation2 + $0xf0] sm:$0xff]
    %v177 = vld [vmem:[#allocation2 + $0xf8] sm:$0xff]
    %v178 = vld [vmem:[%s4] sm:$0x1]
    %v180 = vlaneseq
    %v181 = vshrl.u32 %v180, 7
    %v182 = vsub.s32 0, %v181
    %v183 = vrot.slane %v178, %v182
    %185 = vmatprep.subr.mxu0 0.0
    %186 = vmatpush1.msra.mxu0 %v146
    %187 = vmatprep.subr.mxu0 0.0
    %188 = vmatpush1.msra.mxu0 %v147
    %189 = vmatprep.subr.mxu0 0.0
    %190 = vmatpush1.msra.mxu0 %v148
    %191 = vmatprep.subr.mxu0 0.0
    %192 = vmatpush1.msra.mxu0 %v149
    %193 = vmatprep.subr.mxu0 0.0
    %194 = vmatpush1.msra.mxu0 %v150
    %195 = vmatprep.subr.mxu0 0.0
    %196 = vmatpush1.msra.mxu0 %v151
    %197 = vmatprep.subr.mxu0 0.0
    %198 = vmatpush1.msra.mxu0 %v152
    %199 = vmatprep.subr.mxu0 0.0
    %200 = vmatpush1.msra.mxu0 %v153
    %201 = vmatprep.subr.mxu0 0.0
    %202 = vmatpush1.msra.mxu0 %v154
    %203 = vmatprep.subr.mxu0 0.0
    %204 = vmatpush1.msra.mxu0 %v155
    %205 = vmatprep.subr.mxu0 0.0
    %206 = vmatpush1.msra.mxu0 %v156
    %207 = vmatprep.subr.mxu0 0.0
    %208 = vmatpush1.msra.mxu0 %v157
    %209 = vmatprep.subr.mxu0 0.0
    %210 = vmatpush1.msra.mxu0 %v158
    %211 = vmatprep.subr.mxu0 0.0
    %212 = vmatpush1.msra.mxu0 %v159
    %213 = vmatprep.subr.mxu0 0.0
    %214 = vmatpush1.msra.mxu0 %v160
    %215 = vmatprep.subr.mxu0 0.0
    %216 = vmatpush1.msra.mxu0 %v161
    %217 = vmatprep.subr.mxu0 0.0
    %218 = vmatpush1.msra.mxu0 %v162
    %219 = vmatprep.subr.mxu0 0.0
    %220 = vmatpush1.msra.mxu0 %v163
    %221 = vmatprep.subr.mxu0 0.0
    %222 = vmatpush1.msra.mxu0 %v164
    %223 = vmatprep.subr.mxu0 0.0
    %224 = vmatpush1.msra.mxu0 %v165
    %225 = vmatprep.subr.mxu0 0.0
    %226 = vmatpush1.msra.mxu0 %v166
    %227 = vmatprep.subr.mxu0 0.0
    %228 = vmatpush1.msra.mxu0 %v167
    %229 = vmatprep.subr.mxu0 0.0
    %230 = vmatpush1.msra.mxu0 %v168
    %231 = vmatprep.subr.mxu0 0.0
    %232 = vmatpush1.msra.mxu0 %v169
    %233 = vmatprep.subr.mxu0 0.0
    %234 = vmatpush1.msra.mxu0 %v170
    %235 = vmatprep.subr.mxu0 0.0
    %236 = vmatpush1.msra.mxu0 %v171
    %237 = vmatprep.subr.mxu0 0.0
    %238 = vmatpush1.msra.mxu0 %v172
    %239 = vmatprep.subr.mxu0 0.0
    %240 = vmatpush1.msra.mxu0 %v173
    %241 = vmatprep.subr.mxu0 0.0
    %242 = vmatpush1.msra.mxu0 %v174
    %243 = vmatprep.subr.mxu0 0.0
    %244 = vmatpush1.msra.mxu0 %v175
    %245 = vmatprep.subr.mxu0 0.0
    %246 = vmatpush1.msra.mxu0 %v176
    %247 = vmatprep.subr.mxu0 0.0
    %248 = vmatpush1.msra.mxu0 %v177
    %249 = vmatprep.mubr.f32.mxu0 %v145
    %250 = vmatmul.mubr.f32.gmra.mrb[0].mxu0 %v144
    %v251 = vpop.f32.mrb[0].mxu0
    %v252 = vadd.f32 %v183, %v251
    %v253 = vpop.f32.mrb[0].mxu0
    %254 = vdwg.mxu0
    %v255 = vmax.f32 %v252, 0.0
    %v256 = vld [vmem:[%s5] sm:$0xff]
    %v257 = vld [vmem:[%s5 + $0x8] sm:$0xff]
    %v258 = vld [vmem:[%s5 + $0x10] sm:$0xff]
    %v259 = vld [vmem:[%s5 + $0x18] sm:$0xff]
    %v260 = vld [vmem:[%s5 + $0x20] sm:$0xff]
    %v261 = vld [vmem:[%s5 + $0x28] sm:$0xff]
    %v262 = vld [vmem:[%s5 + $0x30] sm:$0xff]
    %v263 = vld [vmem:[%s5 + $0x38] sm:$0xff]
    %v264 = vld [vmem:[%s5 + $0x40] sm:$0xff]
    %v265 = vld [vmem:[%s5 + $0x48] sm:$0xff]
    %v266 = vld [vmem:[%s5 + $0x50] sm:$0xff]
    %v267 = vld [vmem:[%s5 + $0x58] sm:$0xff]
    %v268 = vld [vmem:[%s5 + $0x60] sm:$0xff]
    %v269 = vld [vmem:[%s5 + $0x68] sm:$0xff]
    %v270 = vld [vmem:[%s5 + $0x70] sm:$0xff]
    %v271 = vld [vmem:[%s5 + $0x78] sm:$0xff]
    %v272 = vld [vmem:[%s6] sm:$0x1]
    %v274 = vlaneseq
    %v275 = vshrl.u32 %v274, 7
    %v276 = vsub.s32 0, %v275
    %v277 = vrot.slane %v272, %v276
    %279 = vmatprep.subr.mxu0 0.0
    %280 = vmatpush1.msra.mxu0 %v256
    %281 = vmatprep.subr.mxu0 0.0
    %282 = vmatpush1.msra.mxu0 %v257
    %283 = vmatprep.subr.mxu0 0.0
    %284 = vmatpush1.msra.mxu0 %v258
    %285 = vmatprep.subr.mxu0 0.0
    %286 = vmatpush1.msra.mxu0 %v259
    %287 = vmatprep.subr.mxu0 0.0
    %288 = vmatpush1.msra.mxu0 %v260
    %289 = vmatprep.subr.mxu0 0.0
    %290 = vmatpush1.msra.mxu0 %v261
    %291 = vmatprep.subr.mxu0 0.0
    %292 = vmatpush1.msra.mxu0 %v262
    %293 = vmatprep.subr.mxu0 0.0
    %294 = vmatpush1.msra.mxu0 %v263
    %295 = vmatprep.subr.mxu0 0.0
    %296 = vmatpush1.msra.mxu0 %v264
    %297 = vmatprep.subr.mxu0 0.0
    %298 = vmatpush1.msra.mxu0 %v265
    %299 = vmatprep.subr.mxu0 0.0
    %300 = vmatpush1.msra.mxu0 %v266
    %301 = vmatprep.subr.mxu0 0.0
    %302 = vmatpush1.msra.mxu0 %v267
    %303 = vmatprep.subr.mxu0 0.0
    %304 = vmatpush1.msra.mxu0 %v268
    %305 = vmatprep.subr.mxu0 0.0
    %306 = vmatpush1.msra.mxu0 %v269
    %307 = vmatprep.subr.mxu0 0.0
    %308 = vmatpush1.msra.mxu0 %v270
    %309 = vmatprep.subr.mxu0 0.0
    %310 = vmatpush1.msra.mxu0 %v271
    %311 = vmatprep.subr.mxu0 0.0
    %312 = vmatpush1.msra.mxu0 0.0
    %313 = vmatprep.subr.mxu0 0.0
    %314 = vmatpush1.msra.mxu0 0.0
    %315 = vmatprep.subr.mxu0 0.0
    %316 = vmatpush1.msra.mxu0 0.0
    %317 = vmatprep.subr.mxu0 0.0
    %318 = vmatpush1.msra.mxu0 0.0
    %319 = vmatprep.subr.mxu0 0.0
    %320 = vmatpush1.msra.mxu0 0.0
    %321 = vmatprep.subr.mxu0 0.0
    %322 = vmatpush1.msra.mxu0 0.0
    %323 = vmatprep.subr.mxu0 0.0
    %324 = vmatpush1.msra.mxu0 0.0
    %325 = vmatprep.subr.mxu0 0.0
    %326 = vmatpush1.msra.mxu0 0.0
    %327 = vmatprep.subr.mxu0 0.0
    %328 = vmatpush1.msra.mxu0 0.0
    %329 = vmatprep.subr.mxu0 0.0
    %330 = vmatpush1.msra.mxu0 0.0
    %331 = vmatprep.subr.mxu0 0.0
    %332 = vmatpush1.msra.mxu0 0.0
    %333 = vmatprep.subr.mxu0 0.0
    %334 = vmatpush1.msra.mxu0 0.0
    %335 = vmatprep.subr.mxu0 0.0
    %336 = vmatpush1.msra.mxu0 0.0
    %337 = vmatprep.subr.mxu0 0.0
    %338 = vmatpush1.msra.mxu0 0.0
    %339 = vmatprep.subr.mxu0 0.0
    %340 = vmatpush1.msra.mxu0 0.0
    %341 = vmatprep.subr.mxu0 0.0
    %342 = vmatpush1.msra.mxu0 0.0
    %343 = vmatprep.mubr.f32.mxu0 0.0
    %344 = vmatmul.mubr.f32.gmra.mrb[0].mxu0 %v255
    %v345 = vpop.f32.mrb[0].mxu0
    %v346 = vadd.f32 %v277, %v345
    %v347 = vpop.f32.mrb[0].mxu0
    %348 = vdwg.mxu0
    %vm349 = vcmask 517120
    %350 = vst.msk [vmem:[#allocation5] sm:$0x3] %vm349, %v346
    // Predicated region
    $region34: #{tpu_custom_call.1} parent=1 // pred_check
      _
    $region35: #{tpu_custom_call.1} parent=1 // pred_check_branch
      %352 = sbr.rel (0) target = $region37
    $region36: #{tpu_custom_call.1} parent=1 // pred_region
      %s354 = ssub.s32 32, 32
      %355 = vsyncadd [#allocation4], %s354
      %s357 = sshll.u32 [#allocation5], 4
      %s358 = int_to_ptr.vmem [resolvable:$true] %s357
      %360 = dma.vmem_to_hbm [thread:$0]  %s358, 32, %s7, [#allocation4]
    $region37: #{tpu_custom_call.1} parent=1 // pred_fallthru
      _
    // Predicated region
    $region38: #{tpu_custom_call.1} parent=1 // pred_check
      _
    $region39: #{tpu_custom_call.1} parent=1 // pred_check_branch
      %362 = sbr.rel (0) target = $region41
    $region40: #{tpu_custom_call.1} parent=1 // pred_region
      %363 = dma.done [#allocation4], 32
    $region41: #{tpu_custom_call.1} parent=1 // pred_fallthru
      _
    %364 = vsyncpa [#allocation3], 1
    %365 = vsyncpa [#allocation4], 1

</llo_original>
